<compile_context>
chip_gen: v6e
topology: v6e:2x2x1
jax: 0.10.0
libtpu: 0.0.40
codegen_flags: <defaults>
</compile_context>

<pallas_src>
from functools import partial

import jax
import jax.numpy as jnp
from jax.experimental import pallas as pl
from jax.experimental.pallas import tpu as pltpu


def _round_up(x: int, m: int) -> int:
    return ((x + m - 1) // m) * m


def sinwave_kernel(feat_ref, time_ref, omega_ref, phase_ref,
                   whead_ref, bhead_ref, sel_ref,
                   out_ref, *, ak_pad, strength):
    feat = feat_ref[...]                                    # [TB, F]
    t = time_ref[...]                                       # [TB, 1]

    # Per-actuator pre-tiled sine basis:
    #   s_tiled[b, a*K + k] = sin(omega_k * t[b] + phase_k)
    # Padded columns carry omega = phase = 0 -> sin(0) = 0 -> no contribution.
    s_tiled = jnp.sin(t * omega_ref[...] + phase_ref[...])  # [TB, AK_pad]

    # Fused head_weight|head_bias linear: one MXU pass over [F, AK_pad+A_pad].
    wc = jnp.dot(feat, whead_ref[...],
                 preferred_element_type=jnp.float32) + bhead_ref[...]
    w = wc[:, :ak_pad]          # [TB, AK_pad]  lane slice at 128 boundary: free
    b = wc[:, ak_pad:]          # [TB, A_pad]

    # bmm(weight[B,A,K], s[B,K,1]) == segment-sum of (w * s_tiled) over each
    # actuator's K columns, expressed as a lane-dense MXU matmul with a 0/1
    # selector [AK_pad, A_pad] (stored bf16 -> exact, cast up for f32 acc).
    act = jnp.dot(w * s_tiled, sel_ref[...].astype(jnp.float32),
                  preferred_element_type=jnp.float32) + b   # [TB, A_pad]

    out_ref[...] = (jnp.tanh(act) * strength).astype(out_ref.dtype)


def sin_wave_basis(features, time, params, *, n_sin_waves, actuation_omega,
                   n_actuators, actuation_strength, batch_tile=1024,
                   out_dtype=jnp.float32):
    features = jnp.asarray(features, jnp.float32)
    time = jnp.asarray(time, jnp.float32)
    B, F = features.shape
    n_omega = len(actuation_omega)
    K = n_sin_waves * n_omega
    A = n_actuators
    AK = A * K

    # Lane-dense, MXU-aligned padded widths.
    AK_pad = _round_up(AK, 128)
    A_pad = _round_up(A, 128)
    W_pad = AK_pad + A_pad

    # ---- batch tiling: balanced tiles, >= 2 grid steps when possible so the
    # ("parallel",) batch axis can shard across v7x's two TensorCores. -------
    n_tiles = max(pl.cdiv(B, int(batch_tile)), 1)
    if n_tiles == 1 and B >= 16:
        n_tiles = 2
    TB = _round_up(pl.cdiv(B, n_tiles), 8)

    # ---- VMEM budget: 48 MiB is safe on v7x (64 MiB/TC) and far below the
    # 128 MiB on v5e/v6e; constants are single-buffered, streamed blocks and
    # the output are double-buffered by the pipeline. ------------------------
    def vmem_est(tb):
        streamed = 2 * tb * (F + 1) * 4                 # feat + time (x2 bufs)
        out_buf = 2 * tb * A_pad * 4                    # output      (x2 bufs)
        consts = (2 * AK_pad * 4                        # omega + phase
                  + F * W_pad * 4 + W_pad * 4           # fused head W + b
                  + AK_pad * A_pad * 2)                 # selector (bf16)
        live = tb * (F + 3 * AK_pad + 2 * A_pad) * 4    # in-flight intermediates
        return streamed + out_buf + consts + live

    VMEM_BUDGET = 48 * 1024 * 1024
    while vmem_est(TB) > VMEM_BUDGET and TB > 8:
        TB = max(8, _round_up(TB // 2, 8))
    n_tiles = pl.cdiv(B, TB)
    B_pad = n_tiles * TB
    vmem_limit = int(min(max(2 * vmem_est(TB), 32 * 1024 * 1024),
                         48 * 1024 * 1024))

    ww, bw, wb, bb = params  # [F, AK], [1, AK], [F, A], [1, A]  (stored [in, out])

    # Pre-tiled omega/phase constants, replicated per actuator, zero-padded.
    omega_k = jnp.repeat(jnp.asarray(actuation_omega, jnp.float32), n_sin_waves)  # [K]
    phase_k = jnp.tile((2.0 * jnp.pi / n_sin_waves)
                       * jnp.arange(n_sin_waves, dtype=jnp.float32), n_omega)     # [K]
    omega_ak = jnp.pad(jnp.tile(omega_k, A), (0, AK_pad - AK))[None, :]   # [1, AK_pad]
    phase_ak = jnp.pad(jnp.tile(phase_k, A), (0, AK_pad - AK))[None, :]   # [1, AK_pad]

    # 0/1 selector [AK_pad, A_pad]; padded rows/cols all zero; bf16 is exact.
    row = jnp.arange(AK_pad)
    col = jnp.arange(A_pad)
    sel = ((row[:, None] // K == col[None, :])
           & (row[:, None] < AK)
           & (col[None, :] < A)).astype(jnp.bfloat16)

    # Zero-pad params, fuse the two heads along the output dim, pad the batch.
    ww_p = jnp.pad(jnp.asarray(ww, jnp.float32), ((0, 0), (0, AK_pad - AK)))
    bw_p = jnp.pad(jnp.asarray(bw, jnp.float32), ((0, 0), (0, AK_pad - AK)))
    wb_p = jnp.pad(jnp.asarray(wb, jnp.float32), ((0, 0), (0, A_pad - A)))
    bb_p = jnp.pad(jnp.asarray(bb, jnp.float32), ((0, 0), (0, A_pad - A)))
    w_head = jnp.concatenate([ww_p, wb_p], axis=1)    # [F, W_pad]
    b_head = jnp.concatenate([bw_p, bb_p], axis=1)    # [1, W_pad]
    feat_p = jnp.pad(features, ((0, B_pad - B), (0, 0)))
    time_p = jnp.pad(time, ((0, B_pad - B), (0, 0)))

    grid = (n_tiles,)

    def batch_map(i):
        return (i, 0)

    def const_map(i):
        return (0, 0)

    single = pl.Buffered(1)   # constants: fetched once, single-buffered
    in_specs = [
        pl.BlockSpec((TB, F), batch_map),                                   # features
        pl.BlockSpec((TB, 1), batch_map),                                   # time
        pl.BlockSpec((1, AK_pad), const_map, pipeline_mode=single),         # omega
        pl.BlockSpec((1, AK_pad), const_map, pipeline_mode=single),         # phase
        pl.BlockSpec((F, W_pad), const_map, pipeline_mode=single),          # fused head W
        pl.BlockSpec((1, W_pad), const_map, pipeline_mode=single),          # fused head b
        pl.BlockSpec((AK_pad, A_pad), const_map, pipeline_mode=single),     # selector
    ]
    out_spec = pl.BlockSpec((TB, A_pad), batch_map)

    out_bytes = B_pad * A_pad * jnp.dtype(out_dtype).itemsize
    cost = pl.CostEstimate(
        flops=2 * B_pad * F * W_pad + 2 * B_pad * AK_pad * A_pad
              + 4 * B_pad * (AK_pad + A_pad),
        transcendentals=B_pad * (AK_pad + A_pad),
        bytes_accessed=4 * (B_pad * (F + 1) + F * W_pad + W_pad + 2 * AK_pad)
                       + 2 * AK_pad * A_pad + out_bytes,
    )

    kernel = partial(sinwave_kernel, ak_pad=AK_pad,
                     strength=float(actuation_strength))

    out = pl.pallas_call(
        kernel,
        out_shape=jax.ShapeDtypeStruct((B_pad, A_pad), out_dtype),
        grid=grid,
        in_specs=in_specs,
        out_specs=out_spec,
        compiler_params=pltpu.CompilerParams(
            dimension_semantics=("parallel",),
            vmem_limit_bytes=vmem_limit,
        ),
        cost_estimate=cost,
    )(feat_p, time_p, omega_ak, phase_ak, w_head, b_head, sel)

    return out[:B, :A]


def reference(features, time, params, *, n_sin_waves, actuation_omega,
              n_actuators, actuation_strength):
    ww, bw, wb, bb = params
    B = features.shape[0]
    weight = (features @ ww + bw).reshape(B, n_actuators, -1)
    bias = features @ wb + bb
    parts = []
    for omega in actuation_omega:
        parts.append(jnp.sin(omega * time + 2.0 * jnp.pi / n_sin_waves
                             * jnp.arange(n_sin_waves, dtype=jnp.float32)))
    s = jnp.concatenate(parts, axis=-1)                    # [B, K]
    act = jnp.einsum('bak,bk->ba', weight, s) + bias
    return jnp.tanh(act) * actuation_strength


if __name__ == "__main__":
    # Small, module-consistent shapes.
    B = 2
    feature_dim = 32
    n_sin_waves = 4
    actuation_omega = [10.0, 20.0]
    n_actuators = 8
    actuation_strength = 0.5
    K = n_sin_waves * len(actuation_omega)
    AK = n_actuators * K

    key = jax.random.PRNGKey(0)
    k_feat, k_time, k_ww, k_bw, k_wb, k_bb = jax.random.split(key, 6)

    features = jax.random.normal(k_feat, (B, feature_dim), jnp.float32)
    time = jax.random.uniform(k_time, (B, 1), jnp.float32)  # obs['time']

    # Deterministic synthetic parameters (Linear stored as [in, out]).
    params = (
        0.1 * jax.random.normal(k_ww, (feature_dim, AK), jnp.float32),
        0.1 * jax.random.normal(k_bw, (1, AK), jnp.float32),
        0.1 * jax.random.normal(k_wb, (feature_dim, n_actuators), jnp.float32),
        0.1 * jax.random.normal(k_bb, (1, n_actuators), jnp.float32),
    )

    out = sin_wave_basis(features, time, params,
                         n_sin_waves=n_sin_waves,
                         actuation_omega=actuation_omega,
                         n_actuators=n_actuators,
                         actuation_strength=actuation_strength)
    out = jax.block_until_ready(out)

    ref = reference(features, time, params,
                    n_sin_waves=n_sin_waves,
                    actuation_omega=actuation_omega,
                    n_actuators=n_actuators,
                    actuation_strength=actuation_strength)
    assert out.shape == (B, n_actuators)
    assert jnp.allclose(out, ref, atol=1e-5, rtol=1e-5)

    print("KERNEL_OK")
</pallas_src>

<mosaic_0001>
module attributes {stable_mosaic.version = 11 : i64} {
  func.func @sinwave_kernel(%arg0: i32, %arg1: memref<8x32xf32, #tpu.memory_space<vmem>>, %arg2: memref<8x1xf32, #tpu.memory_space<vmem>>, %arg3: memref<1x128xf32, #tpu.memory_space<vmem>>, %arg4: memref<1x128xf32, #tpu.memory_space<vmem>>, %arg5: memref<32x256xf32, #tpu.memory_space<vmem>>, %arg6: memref<1x256xf32, #tpu.memory_space<vmem>>, %arg7: memref<128x128xbf16, #tpu.memory_space<vmem>>, %arg8: memref<8x128xf32, #tpu.memory_space<vmem>>) attributes {dimension_semantics = [#tpu.dimension_semantics<parallel>], iteration_bounds = array<i64: 1>, scalar_prefetch = 0 : i64, scratch_operands = 0 : i64, tpu.core_type = #tpu.core_type<tc>, window_params = [{transform_indices = @transform_0, window_bounds = array<i64: 8, 32>}, {transform_indices = @transform_1, window_bounds = array<i64: 8, 1>}, {pipeline_mode = #tpu.pipeline_mode<synchronous>, transform_indices = @transform_2, window_bounds = array<i64: 1, 128>}, {pipeline_mode = #tpu.pipeline_mode<synchronous>, transform_indices = @transform_3, window_bounds = array<i64: 1, 128>}, {pipeline_mode = #tpu.pipeline_mode<synchronous>, transform_indices = @transform_4, window_bounds = array<i64: 32, 256>}, {pipeline_mode = #tpu.pipeline_mode<synchronous>, transform_indices = @transform_5, window_bounds = array<i64: 1, 256>}, {pipeline_mode = #tpu.pipeline_mode<synchronous>, transform_indices = @transform_6, window_bounds = array<i64: 128, 128>}, {transform_indices = @transform_7, window_bounds = array<i64: 8, 128>}]} {
    %c0 = arith.constant 0 : index
    %c0_0 = arith.constant 0 : index
    %0 = vector.load %arg1[%c0, %c0_0] : memref<8x32xf32, #tpu.memory_space<vmem>>, vector<8x32xf32>
    %c0_1 = arith.constant 0 : index
    %c0_2 = arith.constant 0 : index
    %1 = vector.load %arg2[%c0_1, %c0_2] : memref<8x1xf32, #tpu.memory_space<vmem>>, vector<8x1xf32>
    %c0_3 = arith.constant 0 : index
    %c0_4 = arith.constant 0 : index
    %2 = vector.load %arg3[%c0_3, %c0_4] : memref<1x128xf32, #tpu.memory_space<vmem>>, vector<1x128xf32>
    %3 = vector.broadcast %1 : vector<8x1xf32> to vector<8x128xf32>
    %4 = vector.broadcast %2 : vector<1x128xf32> to vector<8x128xf32>
    %5 = arith.mulf %3, %4 : vector<8x128xf32>
    %c0_5 = arith.constant 0 : index
    %c0_6 = arith.constant 0 : index
    %6 = vector.load %arg4[%c0_5, %c0_6] : memref<1x128xf32, #tpu.memory_space<vmem>>, vector<1x128xf32>
    %7 = vector.broadcast %6 : vector<1x128xf32> to vector<8x128xf32>
    %8 = arith.addf %5, %7 : vector<8x128xf32>
    %9 = math.sin %8 : vector<8x128xf32>
    %c0_7 = arith.constant 0 : index
    %c0_8 = arith.constant 0 : index
    %10 = vector.load %arg5[%c0_7, %c0_8] : memref<32x256xf32, #tpu.memory_space<vmem>>, vector<32x256xf32>
    %cst = arith.constant dense<0.000000e+00> : vector<8x256xf32>
    %11 = tpu.matmul %0, %10, %cst {dimension_numbers = #tpu.dot_dimension_numbers<[1], [0], [0], [1], [0, 0, 1, 1], [], []>} : vector<8x32xf32>, vector<32x256xf32>, vector<8x256xf32> -> vector<8x256xf32>
    %c0_9 = arith.constant 0 : index
    %c0_10 = arith.constant 0 : index
    %12 = vector.load %arg6[%c0_9, %c0_10] : memref<1x256xf32, #tpu.memory_space<vmem>>, vector<1x256xf32>
    %13 = vector.broadcast %12 : vector<1x256xf32> to vector<8x256xf32>
    %14 = arith.addf %11, %13 : vector<8x256xf32>
    %15 = vector.extract_strided_slice %14 {offsets = [0, 0], sizes = [8, 128], strides = [1, 1]} : vector<8x256xf32> to vector<8x128xf32>
    %16 = vector.extract_strided_slice %14 {offsets = [0, 128], sizes = [8, 128], strides = [1, 1]} : vector<8x256xf32> to vector<8x128xf32>
    %17 = arith.mulf %15, %9 : vector<8x128xf32>
    %c0_11 = arith.constant 0 : index
    %c0_12 = arith.constant 0 : index
    %18 = vector.load %arg7[%c0_11, %c0_12] : memref<128x128xbf16, #tpu.memory_space<vmem>>, vector<128x128xbf16>
    %19 = arith.extf %18 : vector<128x128xbf16> to vector<128x128xf32>
    %cst_13 = arith.constant dense<0.000000e+00> : vector<8x128xf32>
    %20 = tpu.matmul %17, %19, %cst_13 {dimension_numbers = #tpu.dot_dimension_numbers<[1], [0], [0], [1], [0, 0, 1, 1], [], []>} : vector<8x128xf32>, vector<128x128xf32>, vector<8x128xf32> -> vector<8x128xf32>
    %21 = arith.addf %20, %16 : vector<8x128xf32>
    %22 = math.tanh %21 : vector<8x128xf32>
    %cst_14 = arith.constant 5.000000e-01 : f32
    %23 = vector.broadcast %cst_14 : f32 to vector<8x128xf32>
    %24 = arith.mulf %22, %23 : vector<8x128xf32>
    %c0_15 = arith.constant 0 : index
    %c0_16 = arith.constant 0 : index
    %25 = vector.load %arg8[%c0_15, %c0_16] : memref<8x128xf32, #tpu.memory_space<vmem>>, vector<8x128xf32>
    tpu.vector_store %arg8[%c0_15, %c0_16], %24 {strides = array<i32>} : memref<8x128xf32, #tpu.memory_space<vmem>>, vector<8x128xf32>,
    return
  }
  func.func @transform_0(%arg0: i32) -> (i32, i32) {
    %c0_i32 = arith.constant 0 : i32
    %c0_i32_0 = arith.constant 0 : i32
    return %arg0, %c0_i32 : i32, i32
  }
  func.func @transform_1(%arg0: i32) -> (i32, i32) {
    %c0_i32 = arith.constant 0 : i32
    %c0_i32_0 = arith.constant 0 : i32
    return %arg0, %c0_i32 : i32, i32
  }
  func.func @transform_2(%arg0: i32) -> (i32, i32) {
    %c0_i32 = arith.constant 0 : i32
    %c0_i32_0 = arith.constant 0 : i32
    %c0_i32_1 = arith.constant 0 : i32
    return %c0_i32, %c0_i32_0 : i32, i32
  }
  func.func @transform_3(%arg0: i32) -> (i32, i32) {
    %c0_i32 = arith.constant 0 : i32
    %c0_i32_0 = arith.constant 0 : i32
    %c0_i32_1 = arith.constant 0 : i32
    return %c0_i32, %c0_i32_0 : i32, i32
  }
  func.func @transform_4(%arg0: i32) -> (i32, i32) {
    %c0_i32 = arith.constant 0 : i32
    %c0_i32_0 = arith.constant 0 : i32
    %c0_i32_1 = arith.constant 0 : i32
    return %c0_i32, %c0_i32_0 : i32, i32
  }
  func.func @transform_5(%arg0: i32) -> (i32, i32) {
    %c0_i32 = arith.constant 0 : i32
    %c0_i32_0 = arith.constant 0 : i32
    %c0_i32_1 = arith.constant 0 : i32
    return %c0_i32, %c0_i32_0 : i32, i32
  }
  func.func @transform_6(%arg0: i32) -> (i32, i32) {
    %c0_i32 = arith.constant 0 : i32
    %c0_i32_0 = arith.constant 0 : i32
    %c0_i32_1 = arith.constant 0 : i32
    return %c0_i32, %c0_i32_0 : i32, i32
  }
  func.func @transform_7(%arg0: i32) -> (i32, i32) {
    %c0_i32 = arith.constant 0 : i32
    %c0_i32_0 = arith.constant 0 : i32
    return %arg0, %c0_i32 : i32, i32
  }
}

</mosaic_0001>

<llo_original>
// kernel: tpu_custom_call.1
$region0: #{tpu_custom_call.1}
  #allocation0 [shape = 'u32[]', space=smem, size = 0x4, offset = 0x4, fixed_abs, tag = 'smem constant byte address 0x4 - core index']
  #allocation1 [shape = 'u32[144,128]{1,0:T(1,128)}', space=vmem, size = 0x12000, scoped, tag = 'internal scratch']
  %s0 = inlined_call_operand.vmem [shape: f32[8,32], index: 0, kind: input, shape index: {}]
  %s1 = inlined_call_operand.vmem [shape: f32[8,1], index: 1, kind: input, shape index: {}]
  %s2 = inlined_call_operand.vmem [shape: f32[1,128], index: 2, kind: input, shape index: {}]
  %s3 = inlined_call_operand.vmem [shape: f32[1,128], index: 3, kind: input, shape index: {}]
  %s4 = inlined_call_operand.hbm [shape: f32[32,256], index: 4, kind: input, shape index: {}]
  %s5 = inlined_call_operand.vmem [shape: f32[1,256], index: 5, kind: input, shape index: {}]
  %s6 = inlined_call_operand.hbm [shape: bf16[128,128], index: 6, kind: input, shape index: {}]
  %s7 = inlined_call_operand.hbm [shape: f32[8,128], index: 7, kind: output, shape index: {}]
  %s8 = sld [smem:[#allocation0]]
  $region46: #{tpu_custom_call.1} parent=0
    _
  %s10 = ssub.s32 1, %s8
  %s11 = scalar_select 0, %s10, %s8
  $region1: #{tpu_custom_call.1} parent=0
    #allocation2 [shape = 'u8[32768]{0}', space=vmem, size = 0x8000, scoped, tag = 'input window, operand 4, single buffered']
    #allocation3 [shape = 's32[1]{0}', space=sflag, size = 0x4, scoped, tag = 'scoped memory for tpu_custom_call.1']
    #allocation4 [shape = 's32[1]{0}', space=sflag, size = 0x4, scoped, tag = 'scoped memory for tpu_custom_call.1']
    #allocation5 [shape = 'u8[32768]{0}', space=vmem, size = 0x8000, scoped, tag = 'input window, operand 6, single buffered']
    #allocation6 [shape = 's32[1]{0}', space=sflag, size = 0x4, scoped, tag = 'scoped memory for tpu_custom_call.1']
    #allocation7 [shape = 'u8[4096]{0}', space=vmem, size = 0x1000, scoped, tag = 'output window, operand 0, single buffered']
    %12 = vsyncpa [#allocation3], 0
    %13 = vsyncpa [#allocation6], 0
    %14 = vsyncpa [#allocation4], 0
    // Predicated region
    $region2: #{tpu_custom_call.1} parent=1 // pred_check
      _
    $region3: #{tpu_custom_call.1} parent=1 // pred_check_branch
      %16 = sbr.rel (0) target = $region5
    $region4: #{tpu_custom_call.1} parent=1 // pred_region
      _
    $region5: #{tpu_custom_call.1} parent=1 // pred_fallthru
      _
    // Predicated region
    $region6: #{tpu_custom_call.1} parent=1 // pred_check
      _
    $region7: #{tpu_custom_call.1} parent=1 // pred_check_branch
      %18 = sbr.rel (0) target = $region9
    $region8: #{tpu_custom_call.1} parent=1 // pred_region
      _
    $region9: #{tpu_custom_call.1} parent=1 // pred_fallthru
      _
    // Predicated region
    $region10: #{tpu_custom_call.1} parent=1 // pred_check
      _
    $region11: #{tpu_custom_call.1} parent=1 // pred_check_branch
      %20 = sbr.rel (0) target = $region13
    $region12: #{tpu_custom_call.1} parent=1 // pred_region
      _
    $region13: #{tpu_custom_call.1} parent=1 // pred_fallthru
      _
    // Predicated region
    $region14: #{tpu_custom_call.1} parent=1 // pred_check
      _
    $region15: #{tpu_custom_call.1} parent=1 // pred_check_branch
      %22 = sbr.rel (0) target = $region17
    $region16: #{tpu_custom_call.1} parent=1 // pred_region
      _
    $region17: #{tpu_custom_call.1} parent=1 // pred_fallthru
      _
    // Predicated region
    $region18: #{tpu_custom_call.1} parent=1 // pred_check
      _
    $region19: #{tpu_custom_call.1} parent=1 // pred_check_branch
      %24 = sbr.rel (0) target = $region21
    $region20: #{tpu_custom_call.1} parent=1 // pred_region
      %s26 = ssub.s32 1024, 1024
      %27 = vsyncadd [#allocation3], %s26
      %s28 = sshll.u32 [#allocation2], 4
      %s29 = int_to_ptr.vmem [resolvable:$true] %s28
      %34 = dma.hbm_to_vmem [thread:$0]  %s4, 1024, %s29, [#allocation3], 256, 256, 16
    $region21: #{tpu_custom_call.1} parent=1 // pred_fallthru
      _
    // Predicated region
    $region22: #{tpu_custom_call.1} parent=1 // pred_check
      _
    $region23: #{tpu_custom_call.1} parent=1 // pred_check_branch
      %36 = sbr.rel (0) target = $region25
    $region24: #{tpu_custom_call.1} parent=1 // pred_region
      _
    $region25: #{tpu_custom_call.1} parent=1 // pred_fallthru
      _
    // Predicated region
    $region26: #{tpu_custom_call.1} parent=1 // pred_check
      _
    $region27: #{tpu_custom_call.1} parent=1 // pred_check_branch
      %38 = sbr.rel (0) target = $region29
    $region28: #{tpu_custom_call.1} parent=1 // pred_region
      %s40 = ssub.s32 1024, 1024
      %41 = vsyncadd [#allocation6], %s40
      %s42 = sshll.u32 [#allocation5], 4
      %s43 = int_to_ptr.vmem [resolvable:$true] %s42
      %48 = dma.hbm_to_vmem [thread:$0]  %s6, 1024, %s43, [#allocation6], 64, 64, 4
    $region29: #{tpu_custom_call.1} parent=1 // pred_fallthru
      _
    // Predicated region
    $region30: #{tpu_custom_call.1} parent=1 // pred_check
      _
    $region31: #{tpu_custom_call.1} parent=1 // pred_check_branch
      %50 = sbr.rel (0) target = $region33
    $region32: #{tpu_custom_call.1} parent=1 // pred_region
      %51 = dma.done [#allocation3], 1024
    $region33: #{tpu_custom_call.1} parent=1 // pred_fallthru
      _
    // Predicated region
    $region34: #{tpu_custom_call.1} parent=1 // pred_check
      _
    $region35: #{tpu_custom_call.1} parent=1 // pred_check_branch
      %53 = sbr.rel (0) target = $region37
    $region36: #{tpu_custom_call.1} parent=1 // pred_region
      %54 = dma.done [#allocation6], 1024
    $region37: #{tpu_custom_call.1} parent=1 // pred_fallthru
      _
    %v55 = vld [vmem:[%s0] sm:$0xff]
    %v56 = vld [vmem:[%s1] sm:$0xff]
    %v57 = vld [vmem:[%s2] sm:$0x1]
    %59 = vset.pattern.permute.xlu0 0
    %60 = vperm.xlu0 %59, %v56
    %v61 = vpop.permute.xlu0 %60
    %v64 = vlaneseq
    %v65 = vshrl.u32 %v64, 7
    %v66 = vsub.s32 0, %v65
    %v67 = vrot.slane %v57, %v66
    %v69 = vmul.f32 %v61, %v67
    %v70 = vld [vmem:[%s3] sm:$0x1]
    %v72 = vlaneseq
    %v73 = vshrl.u32 %v72, 7
    %v74 = vsub.s32 0, %v73
    %v75 = vrot.slane %v70, %v74
    %v77 = vadd.f32 %v69, %v75
    %v78 = vand.u32 2147483647, %v77
    %vm79 = vcmp.le.f32.partialorder %v78, 0.7853982
    %vm80 = vcmp.lt.s32.totalorder %v77, 0
    %v81 = vand.u32 %v77, 2139095040
    %v82 = vshrl.u32 %v81, 23
    %v83 = vsub.s32 %v82, 127
    %v84 = vand.u32 2147483647, %v77
    %v85 = vand.u32 %v84, 8388607
    %v86 = vor.u32 %v85, 8388608
    %v87 = vsub.s32 0, %v86
    %v88 = vadd.s32 %v83, 1
    %vm89 = vcmp.gt.s32.totalorder %v88, 0
    %v90 = vsel %vm89, %v88, 0
    %v91 = vshrl.u32 %v90, 5
    %v92 = vand.u32 %v90, 31
    %v93 = vsub.s32 32, %v92
    %v94 = vshrl.u32 683565275, %v93
    %v95 = vshll.u32 683565275, %v92
    %v96 = vshrl.u32 2475754826, %v93
    %v97 = vor.u32 %v95, %v96
    %v98 = vshll.u32 2475754826, %v92
    %v99 = vshrl.u32 2131351028, %v93
    %v100 = vor.u32 %v98, %v99
    %v101 = vshll.u32 2131351028, %v92
    %v102 = vshrl.u32 2102212464, %v93
    %v103 = vor.u32 %v101, %v102
    %v104 = vshll.u32 2102212464, %v92
    %v105 = vshrl.u32 920167782, %v93
    %v106 = vor.u32 %v104, %v105
    %v107 = vshll.u32 920167782, %v92
    %v108 = vshrl.u32 1326507024, %v93
    %v109 = vor.u32 %v107, %v108
    %vm110 = vcmp.lt.s32.totalorder %v91, 1
    %vm111 = vcmp.lt.s32.totalorder %v91, 2
    %vm112 = vcmp.lt.s32.totalorder %v91, 3
    %vm113 = vcmp.lt.s32.totalorder %v91, 4
    %v114 = vsel %vm110, %v94, %v97
    %v115 = vsel %vm113, %v103, 2102212464
    %v116 = vsel %vm112, %v100, %v115
    %v117 = vsel %vm111, %v114, %v116
    %v118 = vsel %vm110, %v97, %v100
    %v119 = vsel %vm113, %v106, 920167782
    %v120 = vsel %vm112, %v103, %v119
    %v121 = vsel %vm111, %v118, %v120
    %v122 = vsel %vm110, %v100, %v103
    %v123 = vsel %vm113, %v109, 1326507024
    %v124 = vsel %vm112, %v106, %v123
    %v125 = vsel %vm111, %v122, %v124
    %v126 = vshll.u32 %v86, 8
    %v127 = vmul.u32.u64.compose %v126, %v125
    %v128 = vextract.low.u32 %v127
    %v129 = vextract.high.u32 %v127
    %v130 = vmul.u32.u64.compose %v126, %v121
    %v131 = vextract.low.u32 %v130
    %v132 = vextract.high.u32 %v130
    %v133 = vmul.u32 %v126, %v117
    %v134 = vadd.s32 %v129, %v131
    %vm135 = vc.u32 %v129, %v131
    %v136 = vadd.s32 %v132, 1
    %v137 = vsel %vm135, %v136, %v132
    %v138 = vadd.s32 %v133, %v137
    %v139 = vadd.s32 %v138, 536870912
    %v140 = vshrl.u32 %v139, 30
    %v141 = vshll.u32 %v140, 30
    %v142 = vsub.s32 %v138, %v141
    %vm143 = vcmp.lt.s32.totalorder %v142, 0
    %v144 = vsub.s32 0, %v142
    %v145 = vsel %vm143, %v144, %v142
    %v146 = vclz %v145
    %v147 = vsub.s32 %v146, 2
    %vm148 = vcmp.gt.s32.totalorder 0, %v147
    %v149 = vsel %vm148, 0, %v147
    %v150 = vsub.s32 32, %v149
    %v151 = vshll.u32 %v142, %v149
    %v152 = vshrl.u32 %v134, %v150
    %v153 = vor.u32 %v151, %v152
    %v154 = vsub.s32 4294967266, %v149
    %v155 = vadd.s32 %v154, 127
    %v156 = vshll.u32 %v155, 23
    %v157 = vor.u32 4788187, %v156
    %v158 = vand.u32 2147483647, %v157
    %v160 = vcvt.s32.f32 %v153
    %v161 = vmul.f32 %v160, %v158
    %v162 = vxor.u32 %v161, 2147483648
    %v163 = vsel %vm80, %v162, %v161
    %v164 = vsub.s32 4, %v140
    %v165 = vsel %vm80, %v164, %v140
    %v166 = vsel %vm79, %v77, %v163
    %v167 = vsel %vm79, 0, %v165
    %v168 = vcosq.f32.pop %v166
    %v169 = vsinq.f32.pop %v166
    %vm170 = vweird.f32 %v77
    %v171 = vadd.s32 %v167, 3
    %v172 = vand.u32 %v171, 3
    %vm173 = vcmp.lt.s32.totalorder %v172, 2
    %vm174 = vcmp.eq.s32.totalorder %v172, 0
    %v175 = vxor.u32 %v169, 2147483648
    %v176 = vsel %vm174, %v168, %v175
    %vm177 = vcmp.eq.s32.totalorder %v172, 2
    %v178 = vxor.u32 %v168, 2147483648
    %v179 = vsel %vm177, %v178, %v169
    %v180 = vsel %vm173, %v176, %v179
    %v181 = vsel %vm170, nan, %v180
    %v182 = vld [vmem:[#allocation2] sm:$0xff]
    %v183 = vld [vmem:[#allocation2 + $0x8] sm:$0xff]
    %v184 = vld [vmem:[#allocation2 + $0x10] sm:$0xff]
    %v185 = vld [vmem:[#allocation2 + $0x18] sm:$0xff]
    %v186 = vld [vmem:[#allocation2 + $0x20] sm:$0xff]
    %v187 = vld [vmem:[#allocation2 + $0x28] sm:$0xff]
    %v188 = vld [vmem:[#allocation2 + $0x30] sm:$0xff]
    %v189 = vld [vmem:[#allocation2 + $0x38] sm:$0xff]
    %v190 = vld [vmem:[%s5] sm:$0x3]
    %v192 = vlaneseq
    %v193 = vshrl.u32 %v192, 7
    %v194 = vsub.s32 0, %v193
    %v195 = vrot.slane %v190, %v194
    %v196 = vlaneseq
    %v197 = vshrl.u32 %v196, 7
    %v198 = vsub.s32 1, %v197
    %v199 = vrot.slane %v190, %v198
    %vm202 = vcmask 261120
    %v204 = vsel %vm202, %v55, 0
    %206 = vmatprep.subr.mxu0 0.0
    %207 = vmatpush1.msra.mxu0 0.0
    %208 = vmatprep.subr.mxu0 0.0
    %209 = vmatpush1.msra.mxu0 0.0
    %210 = vmatprep.subr.mxu0 0.0
    %211 = vmatpush1.msra.mxu0 0.0
    %212 = vmatprep.subr.mxu0 0.0
    %213 = vmatpush1.msra.mxu0 0.0
    %214 = vmatprep.subr.mxu0 0.0
    %215 = vmatpush1.msra.mxu0 0.0
    %216 = vmatprep.subr.mxu0 0.0
    %217 = vmatpush1.msra.mxu0 0.0
    %218 = vmatprep.subr.mxu0 0.0
    %219 = vmatpush1.msra.mxu0 0.0
    %220 = vmatprep.subr.mxu0 0.0
    %221 = vmatpush1.msra.mxu0 0.0
    %222 = vmatprep.subr.mxu0 0.0
    %223 = vmatpush1.msra.mxu0 0.0
    %224 = vmatprep.subr.mxu0 0.0
    %225 = vmatpush1.msra.mxu0 0.0
    %226 = vmatprep.subr.mxu0 0.0
    %227 = vmatpush1.msra.mxu0 0.0
    %228 = vmatprep.subr.mxu0 0.0
    %229 = vmatpush1.msra.mxu0 0.0
    %230 = vmatprep.subr.mxu0 %v189
    %231 = vmatpush1.msra.mxu0 %v188
    %232 = vmatprep.subr.mxu0 %v187
    %233 = vmatpush1.msra.mxu0 %v186
    %234 = vmatprep.subr.mxu0 %v185
    %235 = vmatpush1.msra.mxu0 %v184
    %236 = vmatprep.subr.mxu0 %v183
    %237 = vmatpush1.msra.mxu0 %v182
    %238 = vmatprep.subr.mxu0 0.0
    %239 = vmatpush2.msra.mxu0 0.0
    %240 = vmatprep.subr.mxu0 0.0
    %241 = vmatpush2.msra.mxu0 0.0
    %242 = vmatprep.subr.mxu0 0.0
    %243 = vmatpush2.msra.mxu0 0.0
    %244 = vmatprep.subr.mxu0 0.0
    %245 = vmatpush2.msra.mxu0 0.0
    %246 = vmatprep.subr.mxu0 0.0
    %247 = vmatpush2.msra.mxu0 0.0
    %248 = vmatprep.subr.mxu0 0.0
    %249 = vmatpush2.msra.mxu0 0.0
    %250 = vmatprep.subr.mxu0 0.0
    %251 = vmatpush2.msra.mxu0 0.0
    %252 = vmatprep.subr.mxu0 0.0
    %253 = vmatpush2.msra.mxu0 0.0
    %254 = vmatprep.subr.mxu0 0.0
    %255 = vmatpush2.msra.mxu0 0.0
    %256 = vmatprep.subr.mxu0 0.0
    %257 = vmatpush2.msra.mxu0 0.0
    %258 = vmatprep.subr.mxu0 0.0
    %259 = vmatpush2.msra.mxu0 0.0
    %260 = vmatprep.subr.mxu0 0.0
    %261 = vmatpush2.msra.mxu0 0.0
    %262 = vmatprep.subr.mxu0 0.0
    %263 = vmatpush2.msra.mxu0 0.0
    %264 = vmatprep.subr.mxu0 0.0
    %265 = vmatpush2.msra.mxu0 0.0
    %266 = vmatprep.subr.mxu0 0.0
    %267 = vmatpush2.msra.mxu0 0.0
    %268 = vmatprep.subr.mxu0 0.0
    %269 = vmatpush2.msra.mxu0 0.0
    %270 = vmatprep.mubr.f32.mxu0 0.0
    %271 = vmatmul.mubr.f32.gmra.mxu0 %v204
    %v272 = vpop.f32.mrf.mxu0
    %v273 = vadd.f32 %v195, %v272
    %v274 = vpop.f32.mrf.mxu0
    %v275 = vadd.f32 %v199, %v274
    %276 = vdwg.mxu0
    %v277 = vmul.f32 %v273, %v181
    %v278 = vld [vmem:[#allocation5] sm:$0xf]
    %v279 = vld [vmem:[#allocation5 + $0x4] sm:$0xf]
    %v280 = vld [vmem:[#allocation5 + $0x8] sm:$0xf]
    %v281 = vld [vmem:[#allocation5 + $0xc] sm:$0xf]
    %v282 = vld [vmem:[#allocation5 + $0x10] sm:$0xf]
    %v283 = vld [vmem:[#allocation5 + $0x14] sm:$0xf]
    %v284 = vld [vmem:[#allocation5 + $0x18] sm:$0xf]
    %v285 = vld [vmem:[#allocation5 + $0x1c] sm:$0xf]
    %v286 = vld [vmem:[#allocation5 + $0x20] sm:$0xf]
    %v287 = vld [vmem:[#allocation5 + $0x24] sm:$0xf]
    %v288 = vld [vmem:[#allocation5 + $0x28] sm:$0xf]
    %v289 = vld [vmem:[#allocation5 + $0x2c] sm:$0xf]
    %v290 = vld [vmem:[#allocation5 + $0x30] sm:$0xf]
    %v291 = vld [vmem:[#allocation5 + $0x34] sm:$0xf]
    %v292 = vld [vmem:[#allocation5 + $0x38] sm:$0xf]
    %v293 = vld [vmem:[#allocation5 + $0x3c] sm:$0xf]
    %v294 = vunpack.c.l.bf16 %v278
    %v295 = vunpack.c.l.bf16 %v279
    %v296 = vunpack.c.l.bf16 %v280
    %v297 = vunpack.c.l.bf16 %v281
    %v298 = vunpack.c.l.bf16 %v282
    %v299 = vunpack.c.l.bf16 %v283
    %v300 = vunpack.c.l.bf16 %v284
    %v301 = vunpack.c.l.bf16 %v285
    %v302 = vunpack.c.l.bf16 %v286
    %v303 = vunpack.c.l.bf16 %v287
    %v304 = vunpack.c.l.bf16 %v288
    %v305 = vunpack.c.l.bf16 %v289
    %v306 = vunpack.c.l.bf16 %v290
    %v307 = vunpack.c.l.bf16 %v291
    %v308 = vunpack.c.l.bf16 %v292
    %v309 = vunpack.c.l.bf16 %v293
    %310 = vmatprep.subr.mxu0 0.0
    %311 = vmatpush1.msra.mxu0 %v309
    %312 = vmatprep.subr.mxu0 0.0
    %313 = vmatpush1.msra.mxu0 %v308
    %314 = vmatprep.subr.mxu0 0.0
    %315 = vmatpush1.msra.mxu0 %v307
    %316 = vmatprep.subr.mxu0 0.0
    %317 = vmatpush1.msra.mxu0 %v306
    %318 = vmatprep.subr.mxu0 0.0
    %319 = vmatpush1.msra.mxu0 %v305
    %320 = vmatprep.subr.mxu0 0.0
    %321 = vmatpush1.msra.mxu0 %v304
    %322 = vmatprep.subr.mxu0 0.0
    %323 = vmatpush1.msra.mxu0 %v303
    %324 = vmatprep.subr.mxu0 0.0
    %325 = vmatpush1.msra.mxu0 %v302
    %326 = vmatprep.subr.mxu0 0.0
    %327 = vmatpush1.msra.mxu0 %v301
    %328 = vmatprep.subr.mxu0 0.0
    %329 = vmatpush1.msra.mxu0 %v300
    %330 = vmatprep.subr.mxu0 0.0
    %331 = vmatpush1.msra.mxu0 %v299
    %332 = vmatprep.subr.mxu0 0.0
    %333 = vmatpush1.msra.mxu0 %v298
    %334 = vmatprep.subr.mxu0 0.0
    %335 = vmatpush1.msra.mxu0 %v297
    %336 = vmatprep.subr.mxu0 0.0
    %337 = vmatpush1.msra.mxu0 %v296
    %338 = vmatprep.subr.mxu0 0.0
    %339 = vmatpush1.msra.mxu0 %v295
    %340 = vmatprep.subr.mxu0 0.0
    %341 = vmatpush1.msra.mxu0 %v294
    %342 = vmatprep.subr.mxu0 0.0
    %343 = vmatpush2.msra.mxu0 0.0
    %344 = vmatprep.subr.mxu0 0.0
    %345 = vmatpush2.msra.mxu0 0.0
    %346 = vmatprep.subr.mxu0 0.0
    %347 = vmatpush2.msra.mxu0 0.0
    %348 = vmatprep.subr.mxu0 0.0
    %349 = vmatpush2.msra.mxu0 0.0
    %350 = vmatprep.subr.mxu0 0.0
    %351 = vmatpush2.msra.mxu0 0.0
    %352 = vmatprep.subr.mxu0 0.0
    %353 = vmatpush2.msra.mxu0 0.0
    %354 = vmatprep.subr.mxu0 0.0
    %355 = vmatpush2.msra.mxu0 0.0
    %356 = vmatprep.subr.mxu0 0.0
    %357 = vmatpush2.msra.mxu0 0.0
    %358 = vmatprep.subr.mxu0 0.0
    %359 = vmatpush2.msra.mxu0 0.0
    %360 = vmatprep.subr.mxu0 0.0
    %361 = vmatpush2.msra.mxu0 0.0
    %362 = vmatprep.subr.mxu0 0.0
    %363 = vmatpush2.msra.mxu0 0.0
    %364 = vmatprep.subr.mxu0 0.0
    %365 = vmatpush2.msra.mxu0 0.0
    %366 = vmatprep.subr.mxu0 0.0
    %367 = vmatpush2.msra.mxu0 0.0
    %368 = vmatprep.subr.mxu0 0.0
    %369 = vmatpush2.msra.mxu0 0.0
    %370 = vmatprep.subr.mxu0 0.0
    %371 = vmatpush2.msra.mxu0 0.0
    %372 = vmatprep.subr.mxu0 0.0
    %373 = vmatpush2.msra.mxu0 0.0
    %374 = vmatprep.mubr.f32.mxu0 0.0
    %375 = vmatmul.mubr.f32.gmra.mxu0 %v277
    %v376 = vpop.f32.mrf.mxu0
    %v377 = vadd.f32 %v275, %v376
    %v378 = vpop.f32.mrf.mxu0
    %379 = vdwg.mxu0
    %v380 = vtanh.pop %v377
    %v381 = vmul.f32 %v380, 0.5
    %382 = vst [vmem:[#allocation7] sm:$0xff] %v381
    // Predicated region
    $region38: #{tpu_custom_call.1} parent=1 // pred_check
      _
    $region39: #{tpu_custom_call.1} parent=1 // pred_check_branch
      %384 = sbr.rel (0) target = $region41
    $region40: #{tpu_custom_call.1} parent=1 // pred_region
      %s386 = ssub.s32 128, 128
      %387 = vsyncadd [#allocation4], %s386
      %s389 = sshll.u32 [#allocation7], 4
      %s390 = int_to_ptr.vmem [resolvable:$true] %s389
      %392 = dma.vmem_to_hbm [thread:$0]  %s390, 128, %s7, [#allocation4]
    $region41: #{tpu_custom_call.1} parent=1 // pred_fallthru
      _
    // Predicated region
    $region42: #{tpu_custom_call.1} parent=1 // pred_check
      _
    $region43: #{tpu_custom_call.1} parent=1 // pred_check_branch
      %394 = sbr.rel (0) target = $region45
    $region44: #{tpu_custom_call.1} parent=1 // pred_region
      %395 = dma.done [#allocation4], 128
    $region45: #{tpu_custom_call.1} parent=1 // pred_fallthru
      _
    %396 = vsyncpa [#allocation3], 1
    %397 = vsyncpa [#allocation6], 1
    %398 = vsyncpa [#allocation4], 1

</llo_original>
